<compile_context>
chip_gen: v6e
topology: v6e:2x2x1
jax: 0.10.0
libtpu: 0.0.40
codegen_flags: <defaults>
</compile_context>

<pallas_src>
import jax
import jax.numpy as jnp
from jax.experimental import pallas as pl
from jax.experimental.pallas import tpu as pltpu


def _ce_rows(x, t, w):
    """Row-wise cross entropy, reduction='none'.

    x: [TB, C] float (any dtype, upcast here)
    t: [TB, 1] int32
    w: [1, C] f32 class weights, or None
    returns: [TB, 1] f32 per-row loss
    """
    x = x.astype(jnp.float32)
    C = x.shape[-1]

    # numerically stable log-sum-exp over the class axis
    m = jnp.max(x, axis=-1, keepdims=True)
    lse = jnp.log(jnp.sum(jnp.exp(x - m), axis=-1, keepdims=True)) + m

    # pick out the target logit / target weight with one mask + cross-lane max
    col = jax.lax.broadcasted_iota(jnp.int32, x.shape, 1)      # [TB, C]
    hit = col == t                                             # [TB, C]
    neg_inf = jnp.float32(-jnp.inf)
    x_t = jnp.max(jnp.where(hit, x, neg_inf), axis=-1, keepdims=True)
    loss = lse - x_t
    if w is not None:
        w_t = jnp.max(jnp.where(hit, w, neg_inf), axis=-1, keepdims=True)
        loss = loss * w_t

    # PyTorch ignore_index (-100) / out-of-range targets contribute 0 under reduction='none'.
    valid = jnp.logical_and(t >= 0, t < C)
    return jnp.where(valid, loss, jnp.float32(0.0))


def _fused_kernel(over_ref, sent_ref, tgt_ref, w_ref, over_out_ref, sent_out_ref):
    t = tgt_ref[...]                                           # [TB, 2] int32
    over_out_ref[...] = _ce_rows(over_ref[...], t[:, 0:1], None)
    sent_out_ref[...] = _ce_rows(sent_ref[...], t[:, 1:2], w_ref[...])


def _sent_only_kernel(sent_ref, tgt_ref, w_ref, sent_out_ref):
    t = tgt_ref[...]
    sent_out_ref[...] = _ce_rows(sent_ref[...], t[:, 1:2], w_ref[...])


def _pick_block_rows(B, block_rows):
    if block_rows is not None:
        return block_rows
    if B <= 1024:
        return B          # one full-batch block (block dim == full array dim is always legal)
    return 512            # multiple of 8; large enough to hide the DMA behind compute


class SlideLossPallas:
    """JAX/Pallas port of SlideLoss (use_focal=False branch)."""

    def __init__(self, weights, use_focal=False, block_rows=None):
        if use_focal:
            # TODO(synk): FocalLoss not defined in the reference file.
            raise NotImplementedError("FocalLoss branch is not implemented")
        self.weights = None if weights is None else jnp.asarray(weights, jnp.float32)
        self.block_rows = block_rows

    def __call__(self, logits, targets):
        over_logits, sentiment_logits = logits
        B, C_sent = sentiment_logits.shape

        tgt = targets.astype(jnp.int32)                        # [B, 2]
        w = self.weights if self.weights is not None else jnp.ones((C_sent,), jnp.float32)
        w_row = w.reshape(1, C_sent)

        TB = _pick_block_rows(B, self.block_rows)
        nb = pl.cdiv(B, TB)
        cparams = pltpu.CompilerParams(dimension_semantics=("parallel",))

        if over_logits is not None:
            C_over = over_logits.shape[1]
            over_loss, sent_loss = pl.pallas_call(
                _fused_kernel,
                out_shape=(
                    jax.ShapeDtypeStruct((B, 1), jnp.float32),
                    jax.ShapeDtypeStruct((B, 1), jnp.float32),
                ),
                grid=(nb,),
                in_specs=[
                    pl.BlockSpec((TB, C_over), lambda i: (i, 0)),
                    pl.BlockSpec((TB, C_sent), lambda i: (i, 0)),
                    pl.BlockSpec((TB, 2), lambda i: (i, 0)),
                    pl.BlockSpec((1, C_sent), lambda i: (0, 0)),
                ],
                out_specs=(
                    pl.BlockSpec((TB, 1), lambda i: (i, 0)),
                    pl.BlockSpec((TB, 1), lambda i: (i, 0)),
                ),
                compiler_params=cparams,
            )(over_logits, sentiment_logits, tgt, w_row)
            return over_loss[:, 0], sent_loss[:, 0]

        sent_loss = pl.pallas_call(
            _sent_only_kernel,
            out_shape=jax.ShapeDtypeStruct((B, 1), jnp.float32),
            grid=(nb,),
            in_specs=[
                pl.BlockSpec((TB, C_sent), lambda i: (i, 0)),
                pl.BlockSpec((TB, 2), lambda i: (i, 0)),
                pl.BlockSpec((1, C_sent), lambda i: (0, 0)),
            ],
            out_specs=pl.BlockSpec((TB, 1), lambda i: (i, 0)),
            compiler_params=cparams,
        )(sentiment_logits, tgt, w_row)
        return None, sent_loss[:, 0]


def _reference(logits, targets, weights):
    """Plain-JAX reference for sanity checking."""
    over_logits, sent_logits = logits

    def ce(x, t, w):
        x = x.astype(jnp.float32)
        lse = jax.scipy.special.logsumexp(x, axis=-1)
        x_t = jnp.take_along_axis(x, t[:, None], axis=-1)[:, 0]
        loss = lse - x_t
        if w is not None:
            loss = loss * w[t]
        return loss

    ref_over = None if over_logits is None else ce(over_logits, targets[:, 0], None)
    return ref_over, ce(sent_logits, targets[:, 1], weights)


if __name__ == "__main__":
    key = jax.random.PRNGKey(0)
    k1, k2, k3, k4 = jax.random.split(key, 4)

    B = 8                 # batch
    C_OVER = 2            # "over" head classes
    C_SENT = 7            # sentiment/emotion head classes

    over_logits = jax.random.normal(k1, (B, C_OVER), dtype=jnp.float32)
    sentiment_logits = jax.random.normal(k2, (B, C_SENT), dtype=jnp.float32)
    targets = jnp.stack(
        [
            jax.random.randint(k3, (B,), 0, C_OVER),
            jax.random.randint(k4, (B,), 0, C_SENT),
        ],
        axis=1,
    ).astype(jnp.int32)                                   # [B, 2]

    # deterministic class weights for the sentiment head (module __init__ arg)
    weights = jnp.linspace(0.5, 1.5, C_SENT, dtype=jnp.float32)

    # --- fused two-head path, single full-batch block ---
    loss_mod = SlideLossPallas(weights)
    over_loss, sentiment_loss = loss_mod((over_logits, sentiment_logits), targets)
    jax.block_until_ready(over_loss)
    jax.block_until_ready(sentiment_loss)

    ref_over, ref_sent = _reference((over_logits, sentiment_logits), targets, weights)
    assert jnp.allclose(over_loss, ref_over, atol=1e-4, rtol=1e-4)
    assert jnp.allclose(sentiment_loss, ref_sent, atol=1e-4, rtol=1e-4)

    # --- multi-tile path (grid > 1) and over_logits=None branch ---
    B2 = 48
    k5, k6, k7, k8 = jax.random.split(jax.random.PRNGKey(1), 4)
    over2 = jax.random.normal(k5, (B2, C_OVER), dtype=jnp.float32)
    sent2 = jax.random.normal(k6, (B2, C_SENT), dtype=jnp.float32)
    tgt2 = jnp.stack(
        [
            jax.random.randint(k7, (B2,), 0, C_OVER),
            jax.random.randint(k8, (B2,), 0, C_SENT),
        ],
        axis=1,
    ).astype(jnp.int32)

    loss_mod_tiled = SlideLossPallas(weights, block_rows=16)   # 3 batch tiles
    over_loss2, sent_loss2 = loss_mod_tiled((over2, sent2), tgt2)
    none_over, sent_only = loss_mod_tiled((None, sent2), tgt2)
    jax.block_until_ready(sent_loss2)
    jax.block_until_ready(sent_only)

    ref_over2, ref_sent2 = _reference((over2, sent2), tgt2, weights)
    assert jnp.allclose(over_loss2, ref_over2, atol=1e-4, rtol=1e-4)
    assert jnp.allclose(sent_loss2, ref_sent2, atol=1e-4, rtol=1e-4)
    assert none_over is None
    assert jnp.allclose(sent_only, ref_sent2, atol=1e-4, rtol=1e-4)

    print("KERNEL_OK")
</pallas_src>

<mosaic_0001>
module attributes {stable_mosaic.version = 11 : i64} {
  func.func @_fused_kernel(%arg0: i32, %arg1: memref<8x2xf32, #tpu.memory_space<vmem>>, %arg2: memref<8x7xf32, #tpu.memory_space<vmem>>, %arg3: memref<8x2xi32, #tpu.memory_space<vmem>>, %arg4: memref<1x7xf32, #tpu.memory_space<vmem>>, %arg5: memref<8x1xf32, #tpu.memory_space<vmem>>, %arg6: memref<8x1xf32, #tpu.memory_space<vmem>>) attributes {dimension_semantics = [#tpu.dimension_semantics<parallel>], iteration_bounds = array<i64: 1>, scalar_prefetch = 0 : i64, scratch_operands = 0 : i64, tpu.core_type = #tpu.core_type<tc>, window_params = [{transform_indices = @transform_0, window_bounds = array<i64: 8, 2>}, {transform_indices = @transform_1, window_bounds = array<i64: 8, 7>}, {transform_indices = @transform_2, window_bounds = array<i64: 8, 2>}, {pipeline_mode = #tpu.pipeline_mode<synchronous>, transform_indices = @transform_3, window_bounds = array<i64: 1, 7>}, {transform_indices = @transform_4, window_bounds = array<i64: 8, 1>}, {transform_indices = @transform_5, window_bounds = array<i64: 8, 1>}]} {
    %c0 = arith.constant 0 : index
    %c0_0 = arith.constant 0 : index
    %0 = vector.load %arg3[%c0, %c0_0] : memref<8x2xi32, #tpu.memory_space<vmem>>, vector<8x2xi32>
    %c0_1 = arith.constant 0 : index
    %c0_2 = arith.constant 0 : index
    %1 = vector.load %arg1[%c0_1, %c0_2] : memref<8x2xf32, #tpu.memory_space<vmem>>, vector<8x2xf32>
    %2 = vector.extract_strided_slice %0 {offsets = [0, 0], sizes = [8, 1], strides = [1, 1]} : vector<8x2xi32> to vector<8x1xi32>
    %cst = arith.constant dense<0xFF800000> : vector<8xf32>
    %3 = vector.multi_reduction <maximumf>, %1, %cst [1] : vector<8x2xf32> to vector<8xf32>
    %4 = vector.shape_cast %3 : vector<8xf32> to vector<8x1xf32>
    %5 = vector.broadcast %4 : vector<8x1xf32> to vector<8x2xf32>
    %6 = arith.subf %1, %5 : vector<8x2xf32>
    %7 = math.exp %6 : vector<8x2xf32>
    %cst_3 = arith.constant dense<0.000000e+00> : vector<8xf32>
    %8 = vector.multi_reduction <add>, %7, %cst_3 [1] : vector<8x2xf32> to vector<8xf32>
    %9 = vector.shape_cast %8 : vector<8xf32> to vector<8x1xf32>
    %10 = math.log %9 : vector<8x1xf32>
    %11 = arith.addf %10, %4 : vector<8x1xf32>
    %12 = tpu.iota {dimensions = array<i32: 1>} : vector<8x2xi32>
    %13 = vector.broadcast %2 : vector<8x1xi32> to vector<8x2xi32>
    %14 = arith.cmpi eq, %12, %13 : vector<8x2xi32>
    %cst_4 = arith.constant 0xFF800000 : f32
    %15 = vector.broadcast %cst_4 : f32 to vector<8x2xf32>
    %16 = arith.select %14, %1, %15 : vector<8x2xi1>, vector<8x2xf32>
    %cst_5 = arith.constant dense<0xFF800000> : vector<8xf32>
    %17 = vector.multi_reduction <maximumf>, %16, %cst_5 [1] : vector<8x2xf32> to vector<8xf32>
    %18 = vector.shape_cast %17 : vector<8xf32> to vector<8x1xf32>
    %19 = arith.subf %11, %18 : vector<8x1xf32>
    %c0_i32 = arith.constant 0 : i32
    %20 = vector.broadcast %c0_i32 : i32 to vector<8x1xi32>
    %21 = arith.cmpi sge, %2, %20 : vector<8x1xi32>
    %c2_i32 = arith.constant 2 : i32
    %22 = vector.broadcast %c2_i32 : i32 to vector<8x1xi32>
    %23 = arith.cmpi slt, %2, %22 : vector<8x1xi32>
    %24 = arith.andi %21, %23 : vector<8x1xi1>
    %cst_6 = arith.constant 0.000000e+00 : f32
    %25 = vector.broadcast %cst_6 : f32 to vector<8x1xf32>
    %26 = arith.select %24, %19, %25 : vector<8x1xi1>, vector<8x1xf32>
    %c0_7 = arith.constant 0 : index
    %c0_8 = arith.constant 0 : index
    %27 = vector.load %arg5[%c0_7, %c0_8] : memref<8x1xf32, #tpu.memory_space<vmem>>, vector<8x1xf32>
    tpu.vector_store %arg5[%c0_7, %c0_8], %26 {strides = array<i32>} : memref<8x1xf32, #tpu.memory_space<vmem>>, vector<8x1xf32>,
    %c0_9 = arith.constant 0 : index
    %c0_10 = arith.constant 0 : index
    %28 = vector.load %arg2[%c0_9, %c0_10] : memref<8x7xf32, #tpu.memory_space<vmem>>, vector<8x7xf32>
    %29 = vector.extract_strided_slice %0 {offsets = [0, 1], sizes = [8, 1], strides = [1, 1]} : vector<8x2xi32> to vector<8x1xi32>
    %c0_11 = arith.constant 0 : index
    %c0_12 = arith.constant 0 : index
    %30 = vector.load %arg4[%c0_11, %c0_12] : memref<1x7xf32, #tpu.memory_space<vmem>>, vector<1x7xf32>
    %cst_13 = arith.constant dense<0xFF800000> : vector<8xf32>
    %31 = vector.multi_reduction <maximumf>, %28, %cst_13 [1] : vector<8x7xf32> to vector<8xf32>
    %32 = vector.shape_cast %31 : vector<8xf32> to vector<8x1xf32>
    %33 = vector.broadcast %32 : vector<8x1xf32> to vector<8x7xf32>
    %34 = arith.subf %28, %33 : vector<8x7xf32>
    %35 = math.exp %34 : vector<8x7xf32>
    %cst_14 = arith.constant dense<0.000000e+00> : vector<8xf32>
    %36 = vector.multi_reduction <add>, %35, %cst_14 [1] : vector<8x7xf32> to vector<8xf32>
    %37 = vector.shape_cast %36 : vector<8xf32> to vector<8x1xf32>
    %38 = math.log %37 : vector<8x1xf32>
    %39 = arith.addf %38, %32 : vector<8x1xf32>
    %40 = tpu.iota {dimensions = array<i32: 1>} : vector<8x7xi32>
    %41 = vector.broadcast %29 : vector<8x1xi32> to vector<8x7xi32>
    %42 = arith.cmpi eq, %40, %41 : vector<8x7xi32>
    %cst_15 = arith.constant 0xFF800000 : f32
    %43 = vector.broadcast %cst_15 : f32 to vector<8x7xf32>
    %44 = arith.select %42, %28, %43 : vector<8x7xi1>, vector<8x7xf32>
    %cst_16 = arith.constant dense<0xFF800000> : vector<8xf32>
    %45 = vector.multi_reduction <maximumf>, %44, %cst_16 [1] : vector<8x7xf32> to vector<8xf32>
    %46 = vector.shape_cast %45 : vector<8xf32> to vector<8x1xf32>
    %47 = arith.subf %39, %46 : vector<8x1xf32>
    %cst_17 = arith.constant 0xFF800000 : f32
    %48 = vector.shape_cast %30 : vector<1x7xf32> to vector<1x7xf32>
    %49 = vector.broadcast %48 : vector<1x7xf32> to vector<8x7xf32>
    %50 = vector.broadcast %cst_17 : f32 to vector<8x7xf32>
    %51 = arith.select %42, %49, %50 : vector<8x7xi1>, vector<8x7xf32>
    %cst_18 = arith.constant dense<0xFF800000> : vector<8xf32>
    %52 = vector.multi_reduction <maximumf>, %51, %cst_18 [1] : vector<8x7xf32> to vector<8xf32>
    %53 = vector.shape_cast %52 : vector<8xf32> to vector<8x1xf32>
    %54 = arith.mulf %47, %53 : vector<8x1xf32>
    %c0_i32_19 = arith.constant 0 : i32
    %55 = vector.broadcast %c0_i32_19 : i32 to vector<8x1xi32>
    %56 = arith.cmpi sge, %29, %55 : vector<8x1xi32>
    %c7_i32 = arith.constant 7 : i32
    %57 = vector.broadcast %c7_i32 : i32 to vector<8x1xi32>
    %58 = arith.cmpi slt, %29, %57 : vector<8x1xi32>
    %59 = arith.andi %56, %58 : vector<8x1xi1>
    %cst_20 = arith.constant 0.000000e+00 : f32
    %60 = vector.broadcast %cst_20 : f32 to vector<8x1xf32>
    %61 = arith.select %59, %54, %60 : vector<8x1xi1>, vector<8x1xf32>
    %c0_21 = arith.constant 0 : index
    %c0_22 = arith.constant 0 : index
    %62 = vector.load %arg6[%c0_21, %c0_22] : memref<8x1xf32, #tpu.memory_space<vmem>>, vector<8x1xf32>
    tpu.vector_store %arg6[%c0_21, %c0_22], %61 {strides = array<i32>} : memref<8x1xf32, #tpu.memory_space<vmem>>, vector<8x1xf32>,
    return
  }
  func.func @transform_0(%arg0: i32) -> (i32, i32) {
    %c0_i32 = arith.constant 0 : i32
    %c0_i32_0 = arith.constant 0 : i32
    return %arg0, %c0_i32 : i32, i32
  }
  func.func @transform_1(%arg0: i32) -> (i32, i32) {
    %c0_i32 = arith.constant 0 : i32
    %c0_i32_0 = arith.constant 0 : i32
    return %arg0, %c0_i32 : i32, i32
  }
  func.func @transform_2(%arg0: i32) -> (i32, i32) {
    %c0_i32 = arith.constant 0 : i32
    %c0_i32_0 = arith.constant 0 : i32
    return %arg0, %c0_i32 : i32, i32
  }
  func.func @transform_3(%arg0: i32) -> (i32, i32) {
    %c0_i32 = arith.constant 0 : i32
    %c0_i32_0 = arith.constant 0 : i32
    %c0_i32_1 = arith.constant 0 : i32
    return %c0_i32, %c0_i32_0 : i32, i32
  }
  func.func @transform_4(%arg0: i32) -> (i32, i32) {
    %c0_i32 = arith.constant 0 : i32
    %c0_i32_0 = arith.constant 0 : i32
    return %arg0, %c0_i32 : i32, i32
  }
  func.func @transform_5(%arg0: i32) -> (i32, i32) {
    %c0_i32 = arith.constant 0 : i32
    %c0_i32_0 = arith.constant 0 : i32
    return %arg0, %c0_i32 : i32, i32
  }
}

</mosaic_0001>

<llo_original>
// kernel: tpu_custom_call.1
$region0: #{tpu_custom_call.1}
  #allocation0 [shape = 'u32[]', space=smem, size = 0x4, offset = 0x4, fixed_abs, tag = 'smem constant byte address 0x4 - core index']
  #allocation1 [shape = 'u32[144,128]{1,0:T(1,128)}', space=vmem, size = 0x12000, scoped, tag = 'internal scratch']
  %s0 = inlined_call_operand.vmem [shape: f32[8,2], index: 0, kind: input, shape index: {}]
  %s1 = inlined_call_operand.vmem [shape: f32[8,7], index: 1, kind: input, shape index: {}]
  %s2 = inlined_call_operand.vmem [shape: s32[8,2], index: 2, kind: input, shape index: {}]
  %s3 = inlined_call_operand.vmem [shape: f32[1,7], index: 3, kind: input, shape index: {}]
  %s4 = inlined_call_operand.vmem [shape: f32[8,1], index: 4, kind: output, shape index: {0}]
  %s5 = inlined_call_operand.vmem [shape: f32[8,1], index: 5, kind: output, shape index: {1}]
  %6 = xla_tuple %s4, %s5
  %s7 = sld [smem:[#allocation0]]
  $region34: #{tpu_custom_call.1} parent=0
    _
  %s9 = ssub.s32 1, %s7
  %s10 = scalar_select 0, %s9, %s7
  // Predicated region
  $region2: #{tpu_custom_call.1} parent=0 // pred_check
    _
  $region3: #{tpu_custom_call.1} parent=0 // pred_check_branch
    %12 = sbr.rel (0) target = $region5
  $region4: #{tpu_custom_call.1} parent=0 // pred_region
    _
  $region5: #{tpu_custom_call.1} parent=0 // pred_fallthru
    _
  // Predicated region
  $region6: #{tpu_custom_call.1} parent=0 // pred_check
    _
  $region7: #{tpu_custom_call.1} parent=0 // pred_check_branch
    %14 = sbr.rel (0) target = $region9
  $region8: #{tpu_custom_call.1} parent=0 // pred_region
    _
  $region9: #{tpu_custom_call.1} parent=0 // pred_fallthru
    _
  // Predicated region
  $region10: #{tpu_custom_call.1} parent=0 // pred_check
    _
  $region11: #{tpu_custom_call.1} parent=0 // pred_check_branch
    %16 = sbr.rel (0) target = $region13
  $region12: #{tpu_custom_call.1} parent=0 // pred_region
    _
  $region13: #{tpu_custom_call.1} parent=0 // pred_fallthru
    _
  // Predicated region
  $region14: #{tpu_custom_call.1} parent=0 // pred_check
    _
  $region15: #{tpu_custom_call.1} parent=0 // pred_check_branch
    %18 = sbr.rel (0) target = $region17
  $region16: #{tpu_custom_call.1} parent=0 // pred_region
    _
  $region17: #{tpu_custom_call.1} parent=0 // pred_fallthru
    _
  %v19 = vld [vmem:[%s2] sm:$0xff]
  %v20 = vld [vmem:[%s0] sm:$0xff]
  %vm21 = vcmask 15360
  %v22 = vsel %vm21, %v20, -inf
  %23 = vmax.xlane.f32.xlu0 %v22
  %v24 = vpop.xlane.xlu0 %23
  %v25 = vsub.f32 %v20, %v24
  %v26 = vmul.f32 %v25, 1.442695
  %v27 = vpow.pop %v26
  %v28 = vsel %vm21, %v27, 0.0
  %29 = vadd.xlane.f32.xlu0 %v28
  %v30 = vpop.xlane.xlu0 %29
  %v31 = vlog2.pop %v30
  %v32 = vmul.f32 %v31, 0.6931472
  %v33 = vadd.f32 %v32, %v24
  %v34 = vlaneseq
  %v35 = vand.u32 %v34, 127
  %36 = vset.pattern.permute.xlu0 0
  %37 = vperm.xlu0 %36, %v19
  %v38 = vpop.permute.xlu0 %37
  %vm39 = vcmp.eq.s32.totalorder %v35, %v38
  %v40 = vsel %vm39, %v20, -inf
  %v41 = vsel %vm21, %v40, -inf
  %42 = vmax.xlane.f32.xlu0 %v41
  %v43 = vpop.xlane.xlu0 %42
  %v44 = vsub.f32 %v33, %v43
  %vm45 = vcmp.ge.s32.totalorder %v19, 0
  %vm46 = vcmp.lt.s32.totalorder %v19, 2
  %vm47 = vmand %vm45, %vm46
  %v48 = vsel %vm47, %v44, 0.0
  %vm49 = vcmask 7168
  %50 = vst.msk [vmem:[%s4] sm:$0xff] %vm49, %v48
  %v51 = vld [vmem:[%s1] sm:$0xff]
  %v52 = vld [vmem:[%s3] sm:$0x1]
  %vm53 = vcmask 56320
  %v54 = vsel %vm53, %v51, -inf
  %55 = vmax.xlane.f32.xlu0 %v54
  %v56 = vpop.xlane.xlu0 %55
  %v57 = vsub.f32 %v51, %v56
  %v58 = vmul.f32 %v57, 1.442695
  %v59 = vpow.pop %v58
  %v60 = vsel %vm53, %v59, 0.0
  %61 = vadd.xlane.f32.xlu0 %v60
  %v62 = vpop.xlane.xlu0 %61
  %v63 = vlog2.pop %v62
  %v64 = vmul.f32 %v63, 0.6931472
  %v65 = vadd.f32 %v64, %v56
  %66 = vset.pattern.permute.xlu0 1
  %67 = vperm.xlu0 %66, %v19
  %v68 = vpop.permute.xlu0 %67
  %vm69 = vcmp.eq.s32.totalorder %v35, %v68
  %v70 = vsel %vm69, %v51, -inf
  %v71 = vsel %vm53, %v70, -inf
  %72 = vmax.xlane.f32.xlu0 %v71
  %v73 = vpop.xlane.xlu0 %72
  %v74 = vsub.f32 %v65, %v73
  %v76 = vlaneseq
  %v77 = vshrl.u32 %v76, 7
  %v78 = vsub.s32 0, %v77
  %v79 = vrot.slane %v52, %v78
  %v81 = vsel %vm69, %v79, -inf
  %v82 = vsel %vm53, %v81, -inf
  %83 = vmax.xlane.f32.xlu0 %v82
  %v84 = vpop.xlane.xlu0 %83
  %v85 = vmul.f32 %v74, %v84
  %vm86 = vcmp.lt.s32.totalorder %v19, 7
  %vm87 = vmand %vm45, %vm86
  %v88 = vsel %vm87, %v85, 0.0
  %90 = vrot.lane.b32.xlu0 %v88, 127
  %v91 = vpop.permute.xlu0 %90
  %93 = vst.msk [vmem:[%s5] sm:$0xff] %vm49, %v91
  // Predicated region
  $region18: #{tpu_custom_call.1} parent=0 // pred_check
    _
  $region19: #{tpu_custom_call.1} parent=0 // pred_check_branch
    %95 = sbr.rel (0) target = $region21
  $region20: #{tpu_custom_call.1} parent=0 // pred_region
    _
  $region21: #{tpu_custom_call.1} parent=0 // pred_fallthru
    _
  // Predicated region
  $region22: #{tpu_custom_call.1} parent=0 // pred_check
    _
  $region23: #{tpu_custom_call.1} parent=0 // pred_check_branch
    %97 = sbr.rel (0) target = $region25
  $region24: #{tpu_custom_call.1} parent=0 // pred_region
    _
  $region25: #{tpu_custom_call.1} parent=0 // pred_fallthru
    _
  // Predicated region
  $region26: #{tpu_custom_call.1} parent=0 // pred_check
    _
  $region27: #{tpu_custom_call.1} parent=0 // pred_check_branch
    %99 = sbr.rel (0) target = $region29
  $region28: #{tpu_custom_call.1} parent=0 // pred_region
    _
  $region29: #{tpu_custom_call.1} parent=0 // pred_fallthru
    _
  // Predicated region
  $region30: #{tpu_custom_call.1} parent=0 // pred_check
    _
  $region31: #{tpu_custom_call.1} parent=0 // pred_check_branch
    %101 = sbr.rel (0) target = $region33
  $region32: #{tpu_custom_call.1} parent=0 // pred_region
    _
  $region33: #{tpu_custom_call.1} parent=0 // pred_fallthru
    _

</llo_original>
